<compile_context>
chip_gen: v7x
topology: tpu7x:2x2x1
jax: 0.10.0
libtpu: 0.0.40
codegen_flags: <defaults>
</compile_context>

<pallas_src>
import math
import jax
import jax.numpy as jnp
from jax import lax
from jax.experimental import pallas as pl
from jax.experimental.pallas import tpu as pltpu


def _make_kernel(inv_scale, n_batch):
    """Grid is (B,). For grid index b this computes, for ALL heads and ALL b2:
       p      = softmax(x1[b] @ x2[b]^T * inv_scale + x3[b])       (H, S, S)
       out[b] = stack_over_b2( p[h] @ x3[b2, h] )  laid out as (H*B2, S, S)."""

    def kernel(x1_ref, x2_ref, x3_ref, o_ref):
        b = pl.program_id(0)

        # scores[h] = x1[b,h] @ x2[b,h]^T  (contract last dims; no transpose materialized)
        s = lax.dot_general(
            x1_ref[...], x2_ref[...],
            dimension_numbers=(((2,), (2,)), ((0,), (0,))),
            preferred_element_type=jnp.float32)                  # (H, S, S)
        s = s * inv_scale + x3_ref[b]                            # bias = x3[b]

        # softmax over the last dim; explicit exact reciprocal of the (H, S, 1) denom
        m = jnp.max(s, axis=-1, keepdims=True)
        e = jnp.exp(s - m)
        denom = jnp.sum(e, axis=-1, keepdims=True)               # (H, S, 1)
        p = e * (1.0 / denom)

        # TODO(synk): torch.nn.Dropout is identity in eval mode; training-mode
        # stochastic dropout (pltpu.prng_*) is intentionally not applied here.

        # PV for every b2 inside this single grid step:
        #   out row (h*B2 + b2) = p[h] @ x3[b2, h]
        outs = []
        for q in range(n_batch):                                 # static, tiny (B2 = B)
            o_q = lax.dot_general(
                p, x3_ref[q],
                dimension_numbers=(((2,), (1,)), ((0,), (0,))),
                preferred_element_type=jnp.float32)              # (H, S, S)
            outs.append(o_q)
        o = jnp.stack(outs, axis=1)                              # (H, B2, S, S)
        # Leading-dim merge only (layout-preserving reshape) -> (H*B2, S, S)
        o_ref[...] = o.reshape(o_ref.shape).astype(o_ref.dtype)

    return kernel


def model_forward(x1, x2, x3, n_head, d_model):
    B, H, S, D = x1.shape
    assert x2.shape == (B, H, S, D)
    assert x3.shape == (B, H, S, S)
    inner_dim = n_head * d_model
    inv_scale = 1.0 / math.sqrt(inner_dim)

    # Output emitted directly in (B, H*B2, S, S) order (== (B, H, B2, S, S) bytes),
    # so the PyTorch v7.transpose(1, 2).view(B, -1, inner_dim) is a free reshape.
    out = pl.pallas_call(
        _make_kernel(inv_scale, B),
        out_shape=jax.ShapeDtypeStruct((B, H * B, S, S), x1.dtype),
        grid=(B,),
        in_specs=[
            pl.BlockSpec((None, H, S, D), lambda b: (b, 0, 0, 0)),  # x1[b]
            pl.BlockSpec((None, H, S, D), lambda b: (b, 0, 0, 0)),  # x2[b]
            pl.BlockSpec((B, H, S, S), lambda b: (0, 0, 0, 0)),     # x3, whole array, resident
        ],
        out_specs=pl.BlockSpec((None, H * B, S, S), lambda b: (b, 0, 0, 0)),
        compiler_params=pltpu.CompilerParams(
            dimension_semantics=("parallel",)),                    # v7x: one b per TC
    )(x1, x2, x3)

    return out.reshape(B, -1, inner_dim)


def _reference(x1, x2, x3, n_head, d_model):
    inner_dim = n_head * d_model
    v1 = jnp.einsum("bhsd,bhtd->bhst", x1, x2)
    v3 = v1 / math.sqrt(inner_dim) + x3
    v4 = jax.nn.softmax(v3, axis=-1)
    v6 = v4[:, None]                         # (B, 1, H, S, S)
    v7 = jnp.matmul(v6, x3[None])            # (B, B, H, S, S)
    B = x1.shape[0]
    return jnp.transpose(v7, (0, 2, 1, 3, 4)).reshape(B, -1, inner_dim)


if __name__ == "__main__":
    B, H, S, D = 2, 4, 16, 16          # small shapes consistent with the module
    n_head, d_model = 4, 16            # inner_dim = 64
    dropout_p = 0.1                    # eval mode -> identity

    key = jax.random.PRNGKey(0)
    k1, k2, k3 = jax.random.split(key, 3)
    x1 = jax.random.normal(k1, (B, H, S, D), dtype=jnp.float32)
    x2 = jax.random.normal(k2, (B, H, S, D), dtype=jnp.float32)
    x3 = jax.random.normal(k3, (B, H, S, S), dtype=jnp.float32)

    out = model_forward(x1, x2, x3, n_head, d_model)
    out = jax.block_until_ready(out)

    ref = _reference(x1, x2, x3, n_head, d_model)
    assert out.shape == ref.shape, (out.shape, ref.shape)
    assert jnp.allclose(out, ref, atol=1e-4, rtol=1e-4)
    print("KERNEL_OK")
</pallas_src>

<mosaic_0001>
module attributes {stable_mosaic.version = 11 : i64} {
  func.func @kernel(%arg0: i32, %arg1: memref<1x4x16x16xf32, #tpu.memory_space<vmem>>, %arg2: memref<1x4x16x16xf32, #tpu.memory_space<vmem>>, %arg3: memref<2x4x16x16xf32, #tpu.memory_space<vmem>>, %arg4: memref<1x8x16x16xf32, #tpu.memory_space<vmem>>) attributes {dimension_semantics = [#tpu.dimension_semantics<parallel>], iteration_bounds = array<i64: 2>, scalar_prefetch = 0 : i64, scratch_operands = 0 : i64, tpu.core_type = #tpu.core_type<tc>, window_params = [{transform_indices = @transform_0, window_bounds = array<i64: 1, 4, 16, 16>}, {transform_indices = @transform_1, window_bounds = array<i64: 1, 4, 16, 16>}, {pipeline_mode = #tpu.pipeline_mode<synchronous>, transform_indices = @transform_2, window_bounds = array<i64: 2, 4, 16, 16>}, {transform_indices = @transform_3, window_bounds = array<i64: 1, 8, 16, 16>}]} {
    %c0 = arith.constant 0 : index
    %c0_0 = arith.constant 0 : index
    %c0_1 = arith.constant 0 : index
    %c0_2 = arith.constant 0 : index
    %0 = vector.load %arg1[%c0, %c0_0, %c0_1, %c0_2] : memref<1x4x16x16xf32, #tpu.memory_space<vmem>>, vector<1x4x16x16xf32>
    %1 = vector.shape_cast %0 : vector<1x4x16x16xf32> to vector<4x16x16xf32>
    %c0_3 = arith.constant 0 : index
    %c0_4 = arith.constant 0 : index
    %c0_5 = arith.constant 0 : index
    %c0_6 = arith.constant 0 : index
    %2 = vector.load %arg2[%c0_3, %c0_4, %c0_5, %c0_6] : memref<1x4x16x16xf32, #tpu.memory_space<vmem>>, vector<1x4x16x16xf32>
    %3 = vector.shape_cast %2 : vector<1x4x16x16xf32> to vector<4x16x16xf32>
    %cst = arith.constant dense<0.000000e+00> : vector<4x16x16xf32>
    %4 = tpu.matmul %1, %3, %cst {dimension_numbers = #tpu.dot_dimension_numbers<[2], [2], [1], [1], [0, 0, 0, 1, 1, 1], [0], [0]>} : vector<4x16x16xf32>, vector<4x16x16xf32>, vector<4x16x16xf32> -> vector<4x16x16xf32>
    %cst_7 = arith.constant 1.250000e-01 : f32
    %5 = vector.broadcast %cst_7 : f32 to vector<4x16x16xf32>
    %6 = arith.mulf %4, %5 : vector<4x16x16xf32>
    %7 = arith.index_cast %arg0 : i32 to index
    %c0_8 = arith.constant 0 : index
    %c0_9 = arith.constant 0 : index
    %c0_10 = arith.constant 0 : index
    %8 = vector.load %arg3[%7, %c0_8, %c0_9, %c0_10] : memref<2x4x16x16xf32, #tpu.memory_space<vmem>>, vector<1x4x16x16xf32>
    %9 = vector.shape_cast %8 : vector<1x4x16x16xf32> to vector<4x16x16xf32>
    %10 = arith.addf %6, %9 : vector<4x16x16xf32>
    %cst_11 = arith.constant dense<0xFF800000> : vector<4x16xf32>
    %11 = vector.multi_reduction <maximumf>, %10, %cst_11 [2] : vector<4x16x16xf32> to vector<4x16xf32>
    %12 = vector.shape_cast %11 : vector<4x16xf32> to vector<4x16x1xf32>
    %13 = vector.broadcast %12 : vector<4x16x1xf32> to vector<4x16x16xf32>
    %14 = arith.subf %10, %13 : vector<4x16x16xf32>
    %15 = math.exp %14 : vector<4x16x16xf32>
    %cst_12 = arith.constant dense<0.000000e+00> : vector<4x16xf32>
    %16 = vector.multi_reduction <add>, %15, %cst_12 [2] : vector<4x16x16xf32> to vector<4x16xf32>
    %17 = vector.shape_cast %16 : vector<4x16xf32> to vector<4x16x1xf32>
    %cst_13 = arith.constant 1.000000e+00 : f32
    %18 = vector.broadcast %cst_13 : f32 to vector<4x16x1xf32>
    %19 = arith.divf %18, %17 : vector<4x16x1xf32>
    %20 = vector.broadcast %19 : vector<4x16x1xf32> to vector<4x16x16xf32>
    %21 = arith.mulf %15, %20 : vector<4x16x16xf32>
    %c0_14 = arith.constant 0 : index
    %c0_15 = arith.constant 0 : index
    %c0_16 = arith.constant 0 : index
    %c0_17 = arith.constant 0 : index
    %22 = vector.load %arg3[%c0_14, %c0_15, %c0_16, %c0_17] : memref<2x4x16x16xf32, #tpu.memory_space<vmem>>, vector<1x4x16x16xf32>
    %23 = vector.shape_cast %22 : vector<1x4x16x16xf32> to vector<4x16x16xf32>
    %cst_18 = arith.constant dense<0.000000e+00> : vector<4x16x16xf32>
    %24 = tpu.matmul %21, %23, %cst_18 {dimension_numbers = #tpu.dot_dimension_numbers<[2], [1], [1], [2], [0, 0, 0, 1, 1, 2], [0], [0]>} : vector<4x16x16xf32>, vector<4x16x16xf32>, vector<4x16x16xf32> -> vector<4x16x16xf32>
    %c1 = arith.constant 1 : index
    %c0_19 = arith.constant 0 : index
    %c0_20 = arith.constant 0 : index
    %c0_21 = arith.constant 0 : index
    %25 = vector.load %arg3[%c1, %c0_19, %c0_20, %c0_21] : memref<2x4x16x16xf32, #tpu.memory_space<vmem>>, vector<1x4x16x16xf32>
    %26 = vector.shape_cast %25 : vector<1x4x16x16xf32> to vector<4x16x16xf32>
    %cst_22 = arith.constant dense<0.000000e+00> : vector<4x16x16xf32>
    %27 = tpu.matmul %21, %26, %cst_22 {dimension_numbers = #tpu.dot_dimension_numbers<[2], [1], [1], [2], [0, 0, 0, 1, 1, 2], [0], [0]>} : vector<4x16x16xf32>, vector<4x16x16xf32>, vector<4x16x16xf32> -> vector<4x16x16xf32>
    %28 = vector.shape_cast %24 : vector<4x16x16xf32> to vector<4x1x16x16xf32>
    %29 = vector.shape_cast %27 : vector<4x16x16xf32> to vector<4x1x16x16xf32>
    %30 = tpu.concatenate %28, %29 in 1 : vector<4x1x16x16xf32>, vector<4x1x16x16xf32> -> vector<4x2x16x16xf32>
    %31 = vector.shape_cast %30 : vector<4x2x16x16xf32> to vector<8x16x16xf32>
    %c0_23 = arith.constant 0 : index
    %c0_24 = arith.constant 0 : index
    %c0_25 = arith.constant 0 : index
    %c0_26 = arith.constant 0 : index
    %32 = vector.load %arg4[%c0_23, %c0_24, %c0_25, %c0_26] : memref<1x8x16x16xf32, #tpu.memory_space<vmem>>, vector<1x8x16x16xf32>
    %33 = vector.shape_cast %32 : vector<1x8x16x16xf32> to vector<8x16x16xf32>
    %34 = vector.shape_cast %31 : vector<8x16x16xf32> to vector<1x8x16x16xf32>
    tpu.vector_store %arg4[%c0_23, %c0_24, %c0_25, %c0_26], %34 {strides = array<i32>} : memref<1x8x16x16xf32, #tpu.memory_space<vmem>>, vector<1x8x16x16xf32>,
    return
  }
  func.func @transform_0(%arg0: i32) -> (i32, i32, i32, i32) {
    %c0_i32 = arith.constant 0 : i32
    %c0_i32_0 = arith.constant 0 : i32
    %c0_i32_1 = arith.constant 0 : i32
    %c0_i32_2 = arith.constant 0 : i32
    return %arg0, %c0_i32, %c0_i32_0, %c0_i32_1 : i32, i32, i32, i32
  }
  func.func @transform_1(%arg0: i32) -> (i32, i32, i32, i32) {
    %c0_i32 = arith.constant 0 : i32
    %c0_i32_0 = arith.constant 0 : i32
    %c0_i32_1 = arith.constant 0 : i32
    %c0_i32_2 = arith.constant 0 : i32
    return %arg0, %c0_i32, %c0_i32_0, %c0_i32_1 : i32, i32, i32, i32
  }
  func.func @transform_2(%arg0: i32) -> (i32, i32, i32, i32) {
    %c0_i32 = arith.constant 0 : i32
    %c0_i32_0 = arith.constant 0 : i32
    %c0_i32_1 = arith.constant 0 : i32
    %c0_i32_2 = arith.constant 0 : i32
    %c0_i32_3 = arith.constant 0 : i32
    return %c0_i32, %c0_i32_0, %c0_i32_1, %c0_i32_2 : i32, i32, i32, i32
  }
  func.func @transform_3(%arg0: i32) -> (i32, i32, i32, i32) {
    %c0_i32 = arith.constant 0 : i32
    %c0_i32_0 = arith.constant 0 : i32
    %c0_i32_1 = arith.constant 0 : i32
    %c0_i32_2 = arith.constant 0 : i32
    return %arg0, %c0_i32, %c0_i32_0, %c0_i32_1 : i32, i32, i32, i32
  }
}

</mosaic_0001>

<llo_original>
// kernel: tpu_custom_call.1
$region0: #{tpu_custom_call.1}
  #allocation0 [shape = 'u32[]', space=smem, size = 0x4, offset = 0x4, fixed_abs, tag = 'smem constant byte address 0x4 - core index']
  #allocation1 [shape = 'u32[144,128]{1,0:T(1,128)}', space=vmem, size = 0x12000, scoped, tag = 'internal scratch']
  %s0 = inlined_call_operand.hbm [shape: f32[2,4,16,16], index: 0, kind: input, shape index: {}]
  %s1 = inlined_call_operand.hbm [shape: f32[2,4,16,16], index: 1, kind: input, shape index: {}]
  %s2 = inlined_call_operand.hbm [shape: f32[2,4,16,16], index: 2, kind: input, shape index: {}]
  %s3 = inlined_call_operand.hbm [shape: f32[2,8,16,16], index: 3, kind: output, shape index: {}]
  %s4 = sld [smem:[#allocation0]]
  $region57: #{tpu_custom_call.1} parent=0
    _
  %s6 = ssub.s32 1, %s4
  %s7 = scalar_select 0, %s6, %s4
  $region1: #{tpu_custom_call.1} parent=0
    #allocation2 [shape = 'u8[65536]{0}', space=vmem, size = 0x10000, scoped, tag = 'input window, operand 0']
    #allocation3 [shape = 's32[2]{0}', space=sflag, size = 0x8, scoped, tag = 'scoped memory for tpu_custom_call.1']
    #allocation4 [shape = 's32[2]{0}', space=sflag, size = 0x8, scoped, tag = 'scoped memory for tpu_custom_call.1']
    #allocation5 [shape = 'u8[65536]{0}', space=vmem, size = 0x10000, scoped, tag = 'input window, operand 1']
    #allocation6 [shape = 's32[2]{0}', space=sflag, size = 0x8, scoped, tag = 'scoped memory for tpu_custom_call.1']
    #allocation7 [shape = 'u8[65536]{0}', space=vmem, size = 0x10000, scoped, tag = 'input window, operand 2, single buffered']
    #allocation8 [shape = 'u8[131072]{0}', space=vmem, size = 0x20000, scoped, tag = 'output window, operand 0']
    %8 = vsyncpa [#allocation3], 0
    %s9 = scalar_lea.sflag [#allocation3], 1
    %10 = vsyncpa %s9, 0
    %11 = vsyncpa [#allocation6], 0
    %s12 = scalar_lea.sflag [#allocation6], 1
    %13 = vsyncpa %s12, 0
    %14 = vsyncpa [#allocation4], 0
    %s15 = scalar_lea.sflag [#allocation4], 1
    %16 = vsyncpa %s15, 0
    loop: start=0, step=1, limit=4
    $region2: #{tpu_custom_call.1} parent=1 // loop_pre_header
      _
    $region3: #{tpu_custom_call.1} parent=1 // loop_header
      %s18 = sphi 0, %s22
      %p19 = scmp.ge.s32.totalorder %s18, 4
      %s28 = sphi 0, %s30
      %s31 = sphi 0, %s28
      %s32 = sphi 0, %s31
      %s48 = sphi 0, %s32
      %s54 = sphi 0, %s56
      %s57 = sphi 0, %s54
      %s58 = sphi 0, %s57
      %s74 = sphi 0, %s58
      %s78 = sphi 0, %s78
      %s80 = sphi 0, %s78
      %s81 = sphi 0, %s80
      %s95 = sphi 0, %s81
      %s101 = sphi 0, %s103
      %s104 = sphi 0, %s101
      %s105 = sphi 0, %s104
      %s121 = sphi 0, %s105
    $region4: #{tpu_custom_call.1} parent=1 // loop_header_branch
      %21 = sbr.rel (%p19) target = $region8
    $region5: #{tpu_custom_call.1} parent=1 // loop_body
      %s23 = ssub.s32 %s18, 1
      %s24 = ssub.s32 %s18, 2
      %s25 = sadd.s32 %s18, 1
      %s26 = ssub.s32 %s18, %s25
      %p27 = scmp.eq.s32.totalorder %s26, 0
      %s29 = sadd.s32 %s28, 1
      %s30 = scalar_select %p27, %s28, %s29
      %p33 = pneg %p27
      %p34 = scmp.eq.s32.totalorder %s18, 1
      %p35 = por %p33, %p34
      %p36 = scmp.ne.s32.totalorder %s28, %s31
      %p37 = scmp.eq.s32.totalorder %s18, 0
      %p38 = por %p36, %p37
      %p39 = scmp.ne.s32.totalorder %s28, %s31
      %p40 = scmp.eq.s32.totalorder %s23, 1
      %p41 = por %p39, %p40
      %p42 = scmp.ne.s32.totalorder %s31, %s32
      %p43 = scmp.eq.s32.totalorder %s23, 0
      %p44 = por %p42, %p43
      %p45 = scmp.ne.s32.totalorder %s31, %s32
      %p46 = scmp.eq.s32.totalorder %s24, 1
      %p47 = por %p45, %p46
      %p49 = scmp.ne.s32.totalorder %s32, %s48
      %p50 = scmp.eq.s32.totalorder %s24, 0
      %p51 = por %p49, %p50
      %s52 = ssub.s32 %s18, %s25
      %p53 = scmp.eq.s32.totalorder %s52, 0
      %s55 = sadd.s32 %s54, 1
      %s56 = scalar_select %p53, %s54, %s55
      %p59 = pneg %p53
      %p60 = scmp.eq.s32.totalorder %s18, 1
      %p61 = por %p59, %p60
      %p62 = scmp.ne.s32.totalorder %s54, %s57
      %p63 = scmp.eq.s32.totalorder %s18, 0
      %p64 = por %p62, %p63
      %p65 = scmp.ne.s32.totalorder %s54, %s57
      %p66 = scmp.eq.s32.totalorder %s23, 1
      %p67 = por %p65, %p66
      %p68 = scmp.ne.s32.totalorder %s57, %s58
      %p69 = scmp.eq.s32.totalorder %s23, 0
      %p70 = por %p68, %p69
      %p71 = scmp.ne.s32.totalorder %s57, %s58
      %p72 = scmp.eq.s32.totalorder %s24, 1
      %p73 = por %p71, %p72
      %p75 = scmp.ne.s32.totalorder %s58, %s74
      %p76 = scmp.eq.s32.totalorder %s24, 0
      %p77 = por %p75, %p76
      %s79 = sadd.s32 %s78, 1
      %p82 = scmp.eq.s32.totalorder %s18, 1
      %p83 = scmp.ne.s32.totalorder %s78, %s80
      %p84 = scmp.eq.s32.totalorder %s18, 0
      %p85 = por %p83, %p84
      %p86 = scmp.ne.s32.totalorder %s78, %s80
      %p87 = scmp.eq.s32.totalorder %s23, 1
      %p88 = por %p86, %p87
      %p89 = scmp.ne.s32.totalorder %s80, %s81
      %p90 = scmp.eq.s32.totalorder %s23, 0
      %p91 = por %p89, %p90
      %p92 = scmp.ne.s32.totalorder %s80, %s81
      %p93 = scmp.eq.s32.totalorder %s24, 1
      %p94 = por %p92, %p93
      %p96 = scmp.ne.s32.totalorder %s81, %s95
      %p97 = scmp.eq.s32.totalorder %s24, 0
      %p98 = por %p96, %p97
      %s99 = ssub.s32 %s18, %s25
      %p100 = scmp.eq.s32.totalorder %s99, 0
      %s102 = sadd.s32 %s101, 1
      %s103 = scalar_select %p100, %s101, %s102
      %p106 = pneg %p100
      %p107 = scmp.eq.s32.totalorder %s18, 1
      %p108 = por %p106, %p107
      %p109 = scmp.ne.s32.totalorder %s101, %s104
      %p110 = scmp.eq.s32.totalorder %s18, 0
      %p111 = por %p109, %p110
      %p112 = scmp.ne.s32.totalorder %s101, %s104
      %p113 = scmp.eq.s32.totalorder %s23, 1
      %p114 = por %p112, %p113
      %p115 = scmp.ne.s32.totalorder %s104, %s105
      %p116 = scmp.eq.s32.totalorder %s23, 0
      %p117 = por %p115, %p116
      %p118 = scmp.ne.s32.totalorder %s104, %s105
      %p119 = scmp.eq.s32.totalorder %s24, 1
      %p120 = por %p118, %p119
      %p122 = scmp.ne.s32.totalorder %s105, %s121
      %p123 = scmp.eq.s32.totalorder %s24, 0
      %p124 = por %p122, %p123
      %p125 = scmp.le.s32.totalorder 1, %s18
      %p126 = scmp.lt.s32.totalorder %s18, 3
      %p127 = pnand %p125, %p126
      %p128 = pneg %p127
      // Predicated region
      $region9: #{tpu_custom_call.1} parent=5 // pred_check
        _
      $region10: #{tpu_custom_call.1} parent=5 // pred_check_branch
        %130 = sbr.rel (%p127) target = $region12
      $region11: #{tpu_custom_call.1} parent=5 // pred_region
        %s131 = ssub.s32 %s18, 1
        // Predicated region
        $region13: #{tpu_custom_call.1} parent=11 // pred_check
          %p132 = pneg %p91
        $region14: #{tpu_custom_call.1} parent=11 // pred_check_branch
          %134 = sbr.rel (%p132) target = $region16
        $region15: #{tpu_custom_call.1} parent=11 // pred_region
          %s136 = ssub.s32 2048, 2048
          %137 = vsyncadd [#allocation6], %s136
          %s138 = sshll.u32 [#allocation7], 4
          %s139 = int_to_ptr.vmem [resolvable:$true] %s138
          %144 = dma.hbm_to_vmem [thread:$0]  %s2, 2048, %s139, [#allocation6], 128, 128, 8
        $region16: #{tpu_custom_call.1} parent=11 // pred_fallthru
          _
      $region12: #{tpu_custom_call.1} parent=5 // pred_fallthru
        _
      %p145 = scmp.lt.s32.totalorder %s18, 2
      // Predicated region
      $region17: #{tpu_custom_call.1} parent=5 // pred_check
        %p146 = pneg %p145
      $region18: #{tpu_custom_call.1} parent=5 // pred_check_branch
        %148 = sbr.rel (%p146) target = $region20
      $region19: #{tpu_custom_call.1} parent=5 // pred_region
        // Predicated region
        $region21: #{tpu_custom_call.1} parent=19 // pred_check
          %p149 = pneg %p38
        $region22: #{tpu_custom_call.1} parent=19 // pred_check_branch
          %151 = sbr.rel (%p149) target = $region24
        $region23: #{tpu_custom_call.1} parent=19 // pred_region
          %s152 = sand.u32 %s28, 1
          %s153 = scalar_lea.sflag [#allocation3], %s152
          %s154 = sand.u32 %s28, 1
          %s155 = smul.addr %s154, 64
          %s156 = scalar_lea.vmem [#allocation2], %s155
          %s158 = ssub.s32 1024, 1024
          %159 = vsyncadd %s153, %s158
          %s160 = smul.addr %s18, 8
          %s161 = smul.addr %s160, 128
          %s162 = scalar_lea.hbm %s0, %s161
          %s163 = sshll.u32 %s156, 4
          %s164 = int_to_ptr.vmem [resolvable:$true] %s163
          %169 = dma.hbm_to_vmem [thread:$0]  %s162, 1024, %s164, %s153, 128, 128, 8
        $region24: #{tpu_custom_call.1} parent=19 // pred_fallthru
          _
        // Predicated region
        $region25: #{tpu_custom_call.1} parent=19 // pred_check
          %p170 = pneg %p64
        $region26: #{tpu_custom_call.1} parent=19 // pred_check_branch
          %172 = sbr.rel (%p170) target = $region28
        $region27: #{tpu_custom_call.1} parent=19 // pred_region
          %s173 = sand.u32 %s18, 1
          %s174 = scalar_lea.sflag [#allocation6], %s173
          %s175 = sand.u32 %s54, 1
          %s176 = smul.addr %s175, 64
          %s177 = scalar_lea.vmem [#allocation5], %s176
          %s179 = ssub.s32 1024, 1024
          %180 = vsyncadd %s174, %s179
          %s181 = smul.addr %s18, 8
          %s182 = smul.addr %s181, 128
          %s183 = scalar_lea.hbm %s1, %s182
          %s184 = sshll.u32 %s177, 4
          %s185 = int_to_ptr.vmem [resolvable:$true] %s184
          %190 = dma.hbm_to_vmem [thread:$0]  %s183, 1024, %s185, %s174, 128, 128, 8
        $region28: #{tpu_custom_call.1} parent=19 // pred_fallthru
          _
      $region20: #{tpu_custom_call.1} parent=5 // pred_fallthru
        _
      %p191 = scmp.le.s32.totalorder 1, %s18
      %p192 = scmp.lt.s32.totalorder %s18, 3
      %p193 = pnand %p191, %p192
      %p194 = pneg %p193
      // Predicated region
      $region29: #{tpu_custom_call.1} parent=5 // pred_check
        _
      $region30: #{tpu_custom_call.1} parent=5 // pred_check_branch
        %196 = sbr.rel (%p193) target = $region32
      $region31: #{tpu_custom_call.1} parent=5 // pred_region
        %s197 = ssub.s32 %s18, 1
        %s198 = sand.u32 %s31, 1
        %s199 = scalar_lea.sflag [#allocation3], %s198
        %s200 = sand.u32 %s31, 1
        %s201 = smul.addr %s200, 64
        %s202 = scalar_lea.vmem [#allocation2], %s201
        // Predicated region
        $region33: #{tpu_custom_call.1} parent=31 // pred_check
          %p203 = pneg %p44
        $region34: #{tpu_custom_call.1} parent=31 // pred_check_branch
          %205 = sbr.rel (%p203) target = $region36
        $region35: #{tpu_custom_call.1} parent=31 // pred_region
          %206 = dma.done %s199, 1024
        $region36: #{tpu_custom_call.1} parent=31 // pred_fallthru
          _
        %s207 = sand.u32 %s23, 1
        %s208 = scalar_lea.sflag [#allocation6], %s207
        %s209 = sand.u32 %s57, 1
        %s210 = smul.addr %s209, 64
        %s211 = scalar_lea.vmem [#allocation5], %s210
        // Predicated region
        $region37: #{tpu_custom_call.1} parent=31 // pred_check
          %p212 = pneg %p70
        $region38: #{tpu_custom_call.1} parent=31 // pred_check_branch
          %214 = sbr.rel (%p212) target = $region40
        $region39: #{tpu_custom_call.1} parent=31 // pred_region
          %215 = dma.done %s208, 1024
        $region40: #{tpu_custom_call.1} parent=31 // pred_fallthru
          _
        // Predicated region
        $region41: #{tpu_custom_call.1} parent=31 // pred_check
          %p216 = pneg %p91
        $region42: #{tpu_custom_call.1} parent=31 // pred_check_branch
          %218 = sbr.rel (%p216) target = $region44
        $region43: #{tpu_custom_call.1} parent=31 // pred_region
          %219 = dma.done [#allocation6], 2048
        $region44: #{tpu_custom_call.1} parent=31 // pred_fallthru
          _
        %s220 = sand.u32 %s31, 1
        %s221 = scalar_lea.sflag [#allocation3], %s220
        %s222 = sand.u32 %s31, 1
        %s223 = smul.addr %s222, 64
        %s224 = scalar_lea.vmem [#allocation2], %s223
        %p225 = pneg %p44
        %p226 = pneg %p41
        %s227 = sand.u32 %s23, 1
        %s228 = scalar_lea.sflag [#allocation6], %s227
        %s229 = sand.u32 %s57, 1
        %s230 = smul.addr %s229, 64
        %s231 = scalar_lea.vmem [#allocation5], %s230
        %p232 = pneg %p70
        %p233 = pneg %p67
        %p234 = pneg %p91
        %p235 = pneg %p88
        %p236 = pneg %p117
        %p237 = pneg %p114
        %s238 = sand.u32 %s104, 1
        %s239 = scalar_lea.sflag [#allocation4], %s238
        %s240 = sand.u32 %s104, 1
        %s241 = smul.addr %s240, 128
        %s242 = scalar_lea.vmem [#allocation8], %s241
        %v243 = vld [vmem:[%s202] sm:$0xff]
        %v244 = vld [vmem:[%s202 + $0x8] sm:$0xff]
        %v245 = vld [vmem:[%s202 + $0x10] sm:$0xff]
        %v246 = vld [vmem:[%s202 + $0x18] sm:$0xff]
        %v247 = vld [vmem:[%s202 + $0x20] sm:$0xff]
        %v248 = vld [vmem:[%s202 + $0x28] sm:$0xff]
        %v249 = vld [vmem:[%s202 + $0x30] sm:$0xff]
        %v250 = vld [vmem:[%s202 + $0x38] sm:$0xff]
        %v251 = vld [vmem:[%s211] sm:$0xff]
        %v252 = vld [vmem:[%s211 + $0x8] sm:$0xff]
        %v253 = vld [vmem:[%s211 + $0x10] sm:$0xff]
        %v254 = vld [vmem:[%s211 + $0x18] sm:$0xff]
        %v255 = vld [vmem:[%s211 + $0x20] sm:$0xff]
        %v256 = vld [vmem:[%s211 + $0x28] sm:$0xff]
        %v257 = vld [vmem:[%s211 + $0x30] sm:$0xff]
        %v258 = vld [vmem:[%s211 + $0x38] sm:$0xff]
        %vm259 = vcmask 130048
        %v261 = vsel %vm259, %v243, 0
        %v264 = vsel %vm259, %v244, 0
        %v267 = vsel %vm259, %v251, 0
        %v270 = vsel %vm259, %v252, 0
        %272 = vmatprep.subr.mxu0 0.0
        %273 = vmatpush1.xpose.msra.mxu0 %v267
        %274 = vmatprep.subr.mxu0 0.0
        %275 = vmatpush1.xpose.msra.mxu0 %v270
        %276 = vmatprep.subr.mxu0 0.0
        %277 = vmatpush1.xpose.msra.mxu0 0.0
        %278 = vmatprep.subr.mxu0 0.0
        %279 = vmatpush1.xpose.msra.mxu0 0.0
        %280 = vmatprep.subr.mxu0 0.0
        %281 = vmatpush1.xpose.msra.mxu0 0.0
        %282 = vmatprep.subr.mxu0 0.0
        %283 = vmatpush1.xpose.msra.mxu0 0.0
        %284 = vmatprep.subr.mxu0 0.0
        %285 = vmatpush1.xpose.msra.mxu0 0.0
        %286 = vmatprep.subr.mxu0 0.0
        %287 = vmatpush1.xpose.msra.mxu0 0.0
        %288 = vmatprep.subr.mxu0 0.0
        %289 = vmatpush1.xpose.msra.mxu0 0.0
        %290 = vmatprep.subr.mxu0 0.0
        %291 = vmatpush1.xpose.msra.mxu0 0.0
        %292 = vmatprep.subr.mxu0 0.0
        %293 = vmatpush1.xpose.msra.mxu0 0.0
        %294 = vmatprep.subr.mxu0 0.0
        %295 = vmatpush1.xpose.msra.mxu0 0.0
        %296 = vmatprep.subr.mxu0 0.0
        %297 = vmatpush1.xpose.msra.mxu0 0.0
        %298 = vmatprep.subr.mxu0 0.0
        %299 = vmatpush1.xpose.msra.mxu0 0.0
        %300 = vmatprep.subr.mxu0 0.0
        %301 = vmatpush1.xpose.msra.mxu0 0.0
        %302 = vmatprep.subr.mxu0 0.0
        %303 = vmatpush1.xpose.msra.mxu0 0.0
        %304 = vmatprep.subr.mxu0 0.0
        %305 = vmatpush1.xpose.msra.mxu0 0.0
        %306 = vmatprep.subr.mxu0 0.0
        %307 = vmatpush1.xpose.msra.mxu0 0.0
        %308 = vmatprep.subr.mxu0 0.0
        %309 = vmatpush1.xpose.msra.mxu0 0.0
        %310 = vmatprep.subr.mxu0 0.0
        %311 = vmatpush1.xpose.msra.mxu0 0.0
        %312 = vmatprep.subr.mxu0 0.0
        %313 = vmatpush1.xpose.msra.mxu0 0.0
        %314 = vmatprep.subr.mxu0 0.0
        %315 = vmatpush1.xpose.msra.mxu0 0.0
        %316 = vmatprep.subr.mxu0 0.0
        %317 = vmatpush1.xpose.msra.mxu0 0.0
        %318 = vmatprep.subr.mxu0 0.0
        %319 = vmatpush1.xpose.msra.mxu0 0.0
        %320 = vmatprep.subr.mxu0 0.0
        %321 = vmatpush1.xpose.msra.mxu0 0.0
        %322 = vmatprep.subr.mxu0 0.0
        %323 = vmatpush1.xpose.msra.mxu0 0.0
        %324 = vmatprep.subr.mxu0 0.0
        %325 = vmatpush1.xpose.msra.mxu0 0.0
        %326 = vmatprep.subr.mxu0 0.0
        %327 = vmatpush1.xpose.msra.mxu0 0.0
        %328 = vmatprep.subr.mxu0 0.0
        %329 = vmatpush1.xpose.msra.mxu0 0.0
        %330 = vmatprep.subr.mxu0 0.0
        %331 = vmatpush1.xpose.msra.mxu0 0.0
        %332 = vmatprep.subr.mxu0 0.0
        %333 = vmatpush1.xpose.msra.mxu0 0.0
        %334 = vmatprep.subr.mxu0 0.0
        %335 = vmatpush1.xpose.msra.mxu0 0.0
        %336 = vmatprep.mubr.f32.mxu0 0.0
        %337 = vmatmul.mubr.f32.gmra.mrb[0].mxu0 %v261
        %v338 = vpop.f32.mrb[0].mxu0
        %v339 = vadd.f32 0.0, %v338
        %v340 = vpop.f32.mrb[0].mxu0
        %341 = vmatprep.mubr.f32.mxu0 0.0
        %342 = vmatmul.mubr.f32.gmra.mrb[0].mxu0 %v264
        %v343 = vpop.f32.mrb[0].mxu0
        %v344 = vadd.f32 0.0, %v343
        %v345 = vpop.f32.mrb[0].mxu0
        %346 = vdwg.mxu0
        %v348 = vsel %vm259, %v245, 0
        %v351 = vsel %vm259, %v246, 0
        %v354 = vsel %vm259, %v253, 0
        %v357 = vsel %vm259, %v254, 0
        %359 = vmatprep.subr.mxu0 0.0
        %360 = vmatpush1.xpose.msra.mxu0 %v354
        %361 = vmatprep.subr.mxu0 0.0
        %362 = vmatpush1.xpose.msra.mxu0 %v357
        %363 = vmatprep.subr.mxu0 0.0
        %364 = vmatpush1.xpose.msra.mxu0 0.0
        %365 = vmatprep.subr.mxu0 0.0
        %366 = vmatpush1.xpose.msra.mxu0 0.0
        %367 = vmatprep.subr.mxu0 0.0
        %368 = vmatpush1.xpose.msra.mxu0 0.0
        %369 = vmatprep.subr.mxu0 0.0
        %370 = vmatpush1.xpose.msra.mxu0 0.0
        %371 = vmatprep.subr.mxu0 0.0
        %372 = vmatpush1.xpose.msra.mxu0 0.0
        %373 = vmatprep.subr.mxu0 0.0
        %374 = vmatpush1.xpose.msra.mxu0 0.0
        %375 = vmatprep.subr.mxu0 0.0
        %376 = vmatpush1.xpose.msra.mxu0 0.0
        %377 = vmatprep.subr.mxu0 0.0
        %378 = vmatpush1.xpose.msra.mxu0 0.0
        %379 = vmatprep.subr.mxu0 0.0
        %380 = vmatpush1.xpose.msra.mxu0 0.0
        %381 = vmatprep.subr.mxu0 0.0
        %382 = vmatpush1.xpose.msra.mxu0 0.0
        %383 = vmatprep.subr.mxu0 0.0
        %384 = vmatpush1.xpose.msra.mxu0 0.0
        %385 = vmatprep.subr.mxu0 0.0
        %386 = vmatpush1.xpose.msra.mxu0 0.0
        %387 = vmatprep.subr.mxu0 0.0
        %388 = vmatpush1.xpose.msra.mxu0 0.0
        %389 = vmatprep.subr.mxu0 0.0
        %390 = vmatpush1.xpose.msra.mxu0 0.0
        %391 = vmatprep.subr.mxu0 0.0
        %392 = vmatpush1.xpose.msra.mxu0 0.0
        %393 = vmatprep.subr.mxu0 0.0
        %394 = vmatpush1.xpose.msra.mxu0 0.0
        %395 = vmatprep.subr.mxu0 0.0
        %396 = vmatpush1.xpose.msra.mxu0 0.0
        %397 = vmatprep.subr.mxu0 0.0
        %398 = vmatpush1.xpose.msra.mxu0 0.0
        %399 = vmatprep.subr.mxu0 0.0
        %400 = vmatpush1.xpose.msra.mxu0 0.0
        %401 = vmatprep.subr.mxu0 0.0
        %402 = vmatpush1.xpose.msra.mxu0 0.0
        %403 = vmatprep.subr.mxu0 0.0
        %404 = vmatpush1.xpose.msra.mxu0 0.0
        %405 = vmatprep.subr.mxu0 0.0
        %406 = vmatpush1.xpose.msra.mxu0 0.0
        %407 = vmatprep.subr.mxu0 0.0
        %408 = vmatpush1.xpose.msra.mxu0 0.0
        %409 = vmatprep.subr.mxu0 0.0
        %410 = vmatpush1.xpose.msra.mxu0 0.0
        %411 = vmatprep.subr.mxu0 0.0
        %412 = vmatpush1.xpose.msra.mxu0 0.0
        %413 = vmatprep.subr.mxu0 0.0
        %414 = vmatpush1.xpose.msra.mxu0 0.0
        %415 = vmatprep.subr.mxu0 0.0
        %416 = vmatpush1.xpose.msra.mxu0 0.0
        %417 = vmatprep.subr.mxu0 0.0
        %418 = vmatpush1.xpose.msra.mxu0 0.0
        %419 = vmatprep.subr.mxu0 0.0
        %420 = vmatpush1.xpose.msra.mxu0 0.0
        %421 = vmatprep.subr.mxu0 0.0
        %422 = vmatpush1.xpose.msra.mxu0 0.0
        %423 = vmatprep.mubr.f32.mxu0 0.0
        %424 = vmatmul.mubr.f32.gmra.mrb[0].mxu0 %v348
        %v425 = vpop.f32.mrb[0].mxu0
        %v426 = vadd.f32 0.0, %v425
        %v427 = vpop.f32.mrb[0].mxu0
        %428 = vmatprep.mubr.f32.mxu0 0.0
        %429 = vmatmul.mubr.f32.gmra.mrb[0].mxu0 %v351
        %v430 = vpop.f32.mrb[0].mxu0
        %v431 = vadd.f32 0.0, %v430
        %v432 = vpop.f32.mrb[0].mxu0
        %433 = vdwg.mxu0
        %v435 = vsel %vm259, %v247, 0
        %v438 = vsel %vm259, %v248, 0
        %v441 = vsel %vm259, %v255, 0
        %v444 = vsel %vm259, %v256, 0
        %446 = vmatprep.subr.mxu0 0.0
        %447 = vmatpush1.xpose.msra.mxu0 %v441
        %448 = vmatprep.subr.mxu0 0.0
        %449 = vmatpush1.xpose.msra.mxu0 %v444
        %450 = vmatprep.subr.mxu0 0.0
        %451 = vmatpush1.xpose.msra.mxu0 0.0
        %452 = vmatprep.subr.mxu0 0.0
        %453 = vmatpush1.xpose.msra.mxu0 0.0
        %454 = vmatprep.subr.mxu0 0.0
        %455 = vmatpush1.xpose.msra.mxu0 0.0
        %456 = vmatprep.subr.mxu0 0.0
        %457 = vmatpush1.xpose.msra.mxu0 0.0
        %458 = vmatprep.subr.mxu0 0.0
        %459 = vmatpush1.xpose.msra.mxu0 0.0
        %460 = vmatprep.subr.mxu0 0.0
        %461 = vmatpush1.xpose.msra.mxu0 0.0
        %462 = vmatprep.subr.mxu0 0.0
        %463 = vmatpush1.xpose.msra.mxu0 0.0
        %464 = vmatprep.subr.mxu0 0.0
        %465 = vmatpush1.xpose.msra.mxu0 0.0
        %466 = vmatprep.subr.mxu0 0.0
        %467 = vmatpush1.xpose.msra.mxu0 0.0
        %468 = vmatprep.subr.mxu0 0.0
        %469 = vmatpush1.xpose.msra.mxu0 0.0
        %470 = vmatprep.subr.mxu0 0.0
        %471 = vmatpush1.xpose.msra.mxu0 0.0
        %472 = vmatprep.subr.mxu0 0.0
        %473 = vmatpush1.xpose.msra.mxu0 0.0
        %474 = vmatprep.subr.mxu0 0.0
        %475 = vmatpush1.xpose.msra.mxu0 0.0
        %476 = vmatprep.subr.mxu0 0.0
        %477 = vmatpush1.xpose.msra.mxu0 0.0
        %478 = vmatprep.subr.mxu0 0.0
        %479 = vmatpush1.xpose.msra.mxu0 0.0
        %480 = vmatprep.subr.mxu0 0.0
        %481 = vmatpush1.xpose.msra.mxu0 0.0
        %482 = vmatprep.subr.mxu0 0.0
        %483 = vmatpush1.xpose.msra.mxu0 0.0
        %484 = vmatprep.subr.mxu0 0.0
        %485 = vmatpush1.xpose.msra.mxu0 0.0
        %486 = vmatprep.subr.mxu0 0.0
        %487 = vmatpush1.xpose.msra.mxu0 0.0
        %488 = vmatprep.subr.mxu0 0.0
        %489 = vmatpush1.xpose.msra.mxu0 0.0
        %490 = vmatprep.subr.mxu0 0.0
        %491 = vmatpush1.xpose.msra.mxu0 0.0
        %492 = vmatprep.subr.mxu0 0.0
        %493 = vmatpush1.xpose.msra.mxu0 0.0
        %494 = vmatprep.subr.mxu0 0.0
        %495 = vmatpush1.xpose.msra.mxu0 0.0
        %496 = vmatprep.subr.mxu0 0.0
        %497 = vmatpush1.xpose.msra.mxu0 0.0
        %498 = vmatprep.subr.mxu0 0.0
        %499 = vmatpush1.xpose.msra.mxu0 0.0
        %500 = vmatprep.subr.mxu0 0.0
        %501 = vmatpush1.xpose.msra.mxu0 0.0
        %502 = vmatprep.subr.mxu0 0.0
        %503 = vmatpush1.xpose.msra.mxu0 0.0
        %504 = vmatprep.subr.mxu0 0.0
        %505 = vmatpush1.xpose.msra.mxu0 0.0
        %506 = vmatprep.subr.mxu0 0.0
        %507 = vmatpush1.xpose.msra.mxu0 0.0
        %508 = vmatprep.subr.mxu0 0.0
        %509 = vmatpush1.xpose.msra.mxu0 0.0
        %510 = vmatprep.mubr.f32.mxu0 0.0
        %511 = vmatmul.mubr.f32.gmra.mrb[0].mxu0 %v435
        %v512 = vpop.f32.mrb[0].mxu0
        %v513 = vadd.f32 0.0, %v512
        %v514 = vpop.f32.mrb[0].mxu0
        %515 = vmatprep.mubr.f32.mxu0 0.0
        %516 = vmatmul.mubr.f32.gmra.mrb[0].mxu0 %v438
        %v517 = vpop.f32.mrb[0].mxu0
        %v518 = vadd.f32 0.0, %v517
        %v519 = vpop.f32.mrb[0].mxu0
        %520 = vdwg.mxu0
        %v522 = vsel %vm259, %v249, 0
        %v525 = vsel %vm259, %v250, 0
        %v528 = vsel %vm259, %v257, 0
        %v531 = vsel %vm259, %v258, 0
        %533 = vmatprep.subr.mxu0 0.0
        %534 = vmatpush1.xpose.msra.mxu0 %v528
        %535 = vmatprep.subr.mxu0 0.0
        %536 = vmatpush1.xpose.msra.mxu0 %v531
        %537 = vmatprep.subr.mxu0 0.0
        %538 = vmatpush1.xpose.msra.mxu0 0.0
        %539 = vmatprep.subr.mxu0 0.0
        %540 = vmatpush1.xpose.msra.mxu0 0.0
        %541 = vmatprep.subr.mxu0 0.0
        %542 = vmatpush1.xpose.msra.mxu0 0.0
        %543 = vmatprep.subr.mxu0 0.0
        %544 = vmatpush1.xpose.msra.mxu0 0.0
        %545 = vmatprep.subr.mxu0 0.0
        %546 = vmatpush1.xpose.msra.mxu0 0.0
        %547 = vmatprep.subr.mxu0 0.0
        %548 = vmatpush1.xpose.msra.mxu0 0.0
        %549 = vmatprep.subr.mxu0 0.0
        %550 = vmatpush1.xpose.msra.mxu0 0.0
        %551 = vmatprep.subr.mxu0 0.0
        %552 = vmatpush1.xpose.msra.mxu0 0.0
        %553 = vmatprep.subr.mxu0 0.0
        %554 = vmatpush1.xpose.msra.mxu0 0.0
        %555 = vmatprep.subr.mxu0 0.0
        %556 = vmatpush1.xpose.msra.mxu0 0.0
        %557 = vmatprep.subr.mxu0 0.0
        %558 = vmatpush1.xpose.msra.mxu0 0.0
        %559 = vmatprep.subr.mxu0 0.0
        %560 = vmatpush1.xpose.msra.mxu0 0.0
        %561 = vmatprep.subr.mxu0 0.0
        %562 = vmatpush1.xpose.msra.mxu0 0.0
        %563 = vmatprep.subr.mxu0 0.0
        %564 = vmatpush1.xpose.msra.mxu0 0.0
        %565 = vmatprep.subr.mxu0 0.0
        %566 = vmatpush1.xpose.msra.mxu0 0.0
        %567 = vmatprep.subr.mxu0 0.0
        %568 = vmatpush1.xpose.msra.mxu0 0.0
        %569 = vmatprep.subr.mxu0 0.0
        %570 = vmatpush1.xpose.msra.mxu0 0.0
        %571 = vmatprep.subr.mxu0 0.0
        %572 = vmatpush1.xpose.msra.mxu0 0.0
        %573 = vmatprep.subr.mxu0 0.0
        %574 = vmatpush1.xpose.msra.mxu0 0.0
        %575 = vmatprep.subr.mxu0 0.0
        %576 = vmatpush1.xpose.msra.mxu0 0.0
        %577 = vmatprep.subr.mxu0 0.0
        %578 = vmatpush1.xpose.msra.mxu0 0.0
        %579 = vmatprep.subr.mxu0 0.0
        %580 = vmatpush1.xpose.msra.mxu0 0.0
        %581 = vmatprep.subr.mxu0 0.0
        %582 = vmatpush1.xpose.msra.mxu0 0.0
        %583 = vmatprep.subr.mxu0 0.0
        %584 = vmatpush1.xpose.msra.mxu0 0.0
        %585 = vmatprep.subr.mxu0 0.0
        %586 = vmatpush1.xpose.msra.mxu0 0.0
        %587 = vmatprep.subr.mxu0 0.0
        %588 = vmatpush1.xpose.msra.mxu0 0.0
        %589 = vmatprep.subr.mxu0 0.0
        %590 = vmatpush1.xpose.msra.mxu0 0.0
        %591 = vmatprep.subr.mxu0 0.0
        %592 = vmatpush1.xpose.msra.mxu0 0.0
        %593 = vmatprep.subr.mxu0 0.0
        %594 = vmatpush1.xpose.msra.mxu0 0.0
        %595 = vmatprep.subr.mxu0 0.0
        %596 = vmatpush1.xpose.msra.mxu0 0.0
        %597 = vmatprep.mubr.f32.mxu0 0.0
        %598 = vmatmul.mubr.f32.gmra.mrb[0].mxu0 %v522
        %v599 = vpop.f32.mrb[0].mxu0
        %v600 = vadd.f32 0.0, %v599
        %v601 = vpop.f32.mrb[0].mxu0
        %602 = vmatprep.mubr.f32.mxu0 0.0
        %603 = vmatmul.mubr.f32.gmra.mrb[0].mxu0 %v525
        %v604 = vpop.f32.mrb[0].mxu0
        %v605 = vadd.f32 0.0, %v604
        %v606 = vpop.f32.mrb[0].mxu0
        %607 = vdwg.mxu0
        %v608 = vmul.f32 %v339, 0.125
        %v609 = vmul.f32 %v344, 0.125
        %v610 = vmul.f32 %v426, 0.125
        %v611 = vmul.f32 %v431, 0.125
        %v612 = vmul.f32 %v513, 0.125
        %v613 = vmul.f32 %v518, 0.125
        %v614 = vmul.f32 %v600, 0.125
        %v615 = vmul.f32 %v605, 0.125
        %s616 = smul.u32 %s23, 64
        %s617 = scalar_lea.vmem [#allocation7], %s616
        %v618 = vld [vmem:[%s617] sm:$0xff]
        %v619 = vld [vmem:[%s617 + $0x8] sm:$0xff]
        %v620 = vld [vmem:[%s617 + $0x10] sm:$0xff]
        %v621 = vld [vmem:[%s617 + $0x18] sm:$0xff]
        %v622 = vld [vmem:[%s617 + $0x20] sm:$0xff]
        %v623 = vld [vmem:[%s617 + $0x28] sm:$0xff]
        %v624 = vld [vmem:[%s617 + $0x30] sm:$0xff]
        %v625 = vld [vmem:[%s617 + $0x38] sm:$0xff]
        %v626 = vadd.f32 %v608, %v618
        %v627 = vadd.f32 %v609, %v619
        %v628 = vadd.f32 %v610, %v620
        %v629 = vadd.f32 %v611, %v621
        %v630 = vadd.f32 %v612, %v622
        %v631 = vadd.f32 %v613, %v623
        %v632 = vadd.f32 %v614, %v624
        %v633 = vadd.f32 %v615, %v625
        %v634 = vsel %vm259, %v626, -inf
        %635 = vmax.xlane.f32.xlu0 %v634
        %v636 = vpop.xlane.xlu0 %635
        %v637 = vsel %vm259, %v627, -inf
        %638 = vmax.xlane.f32.xlu0 %v637
        %v639 = vpop.xlane.xlu0 %638
        %v640 = vsel %vm259, %v628, -inf
        %641 = vmax.xlane.f32.xlu0 %v640
        %v642 = vpop.xlane.xlu0 %641
        %v643 = vsel %vm259, %v629, -inf
        %644 = vmax.xlane.f32.xlu0 %v643
        %v645 = vpop.xlane.xlu0 %644
        %v646 = vsel %vm259, %v630, -inf
        %647 = vmax.xlane.f32.xlu0 %v646
        %v648 = vpop.xlane.xlu0 %647
        %v649 = vsel %vm259, %v631, -inf
        %650 = vmax.xlane.f32.xlu0 %v649
        %v651 = vpop.xlane.xlu0 %650
        %v652 = vsel %vm259, %v632, -inf
        %653 = vmax.xlane.f32.xlu0 %v652
        %v654 = vpop.xlane.xlu0 %653
        %v655 = vsel %vm259, %v633, -inf
        %656 = vmax.xlane.f32.xlu0 %v655
        %v657 = vpop.xlane.xlu0 %656
        %v658 = vsub.f32 %v626, %v636
        %v659 = vsub.f32 %v627, %v639
        %v660 = vsub.f32 %v628, %v642
        %v661 = vsub.f32 %v629, %v645
        %v662 = vsub.f32 %v630, %v648
        %v663 = vsub.f32 %v631, %v651
        %v664 = vsub.f32 %v632, %v654
        %v665 = vsub.f32 %v633, %v657
        %v666 = vmul.f32 %v658, 1.442695
        %v667 = vpow.pop %v666
        %v668 = vmul.f32 %v659, 1.442695
        %v669 = vpow.pop %v668
        %v670 = vmul.f32 %v660, 1.442695
        %v671 = vpow.pop %v670
        %v672 = vmul.f32 %v661, 1.442695
        %v673 = vpow.pop %v672
        %v674 = vmul.f32 %v662, 1.442695
        %v675 = vpow.pop %v674
        %v676 = vmul.f32 %v663, 1.442695
        %v677 = vpow.pop %v676
        %v678 = vmul.f32 %v664, 1.442695
        %v679 = vpow.pop %v678
        %v680 = vmul.f32 %v665, 1.442695
        %v681 = vpow.pop %v680
        %v682 = vsel %vm259, %v667, 0.0
        %683 = vadd.xlane.f32.xlu0 %v682
        %v684 = vpop.xlane.xlu0 %683
        %v685 = vsel %vm259, %v669, 0.0
        %686 = vadd.xlane.f32.xlu0 %v685
        %v687 = vpop.xlane.xlu0 %686
        %v688 = vsel %vm259, %v671, 0.0
        %689 = vadd.xlane.f32.xlu0 %v688
        %v690 = vpop.xlane.xlu0 %689
        %v691 = vsel %vm259, %v673, 0.0
        %692 = vadd.xlane.f32.xlu0 %v691
        %v693 = vpop.xlane.xlu0 %692
        %v694 = vsel %vm259, %v675, 0.0
        %695 = vadd.xlane.f32.xlu0 %v694
        %v696 = vpop.xlane.xlu0 %695
        %v697 = vsel %vm259, %v677, 0.0
        %698 = vadd.xlane.f32.xlu0 %v697
        %v699 = vpop.xlane.xlu0 %698
        %v700 = vsel %vm259, %v679, 0.0
        %701 = vadd.xlane.f32.xlu0 %v700
        %v702 = vpop.xlane.xlu0 %701
        %v703 = vsel %vm259, %v681, 0.0
        %704 = vadd.xlane.f32.xlu0 %v703
        %v705 = vpop.xlane.xlu0 %704
        %v706 = vrcp.pop %v684
        %v707 = vmul.f32 1.0, %v706
        %v708 = vrcp.pop %v687
        %v709 = vmul.f32 1.0, %v708
        %v710 = vrcp.pop %v690
        %v711 = vmul.f32 1.0, %v710
        %v712 = vrcp.pop %v693
        %v713 = vmul.f32 1.0, %v712
        %v714 = vrcp.pop %v696
        %v715 = vmul.f32 1.0, %v714
        %v716 = vrcp.pop %v699
        %v717 = vmul.f32 1.0, %v716
        %v718 = vrcp.pop %v702
        %v719 = vmul.f32 1.0, %v718
        %v720 = vrcp.pop %v705
        %v721 = vmul.f32 1.0, %v720
        %v722 = vmul.f32 %v667, %v707
        %v723 = vmul.f32 %v669, %v709
        %v724 = vmul.f32 %v671, %v711
        %v725 = vmul.f32 %v673, %v713
        %v726 = vmul.f32 %v675, %v715
        %v727 = vmul.f32 %v677, %v717
        %v728 = vmul.f32 %v679, %v719
        %v729 = vmul.f32 %v681, %v721
        %v730 = vld [vmem:[#allocation7] sm:$0xff]
        %v731 = vld [vmem:[#allocation7 + $0x8] sm:$0xff]
        %v732 = vld [vmem:[#allocation7 + $0x10] sm:$0xff]
        %v733 = vld [vmem:[#allocation7 + $0x18] sm:$0xff]
        %v734 = vld [vmem:[#allocation7 + $0x20] sm:$0xff]
        %v735 = vld [vmem:[#allocation7 + $0x28] sm:$0xff]
        %v736 = vld [vmem:[#allocation7 + $0x30] sm:$0xff]
        %v737 = vld [vmem:[#allocation7 + $0x38] sm:$0xff]
        %v739 = vsel %vm259, %v722, 0
        %v742 = vsel %vm259, %v723, 0
        %744 = vmatprep.subr.mxu0 0.0
        %745 = vmatpush1.msra.mxu0 %v730
        %746 = vmatprep.subr.mxu0 0.0
        %747 = vmatpush1.msra.mxu0 %v731
        %748 = vmatprep.subr.mxu0 0.0
        %749 = vmatpush1.msra.mxu0 0.0
        %750 = vmatprep.subr.mxu0 0.0
        %751 = vmatpush1.msra.mxu0 0.0
        %752 = vmatprep.subr.mxu0 0.0
        %753 = vmatpush1.msra.mxu0 0.0
        %754 = vmatprep.subr.mxu0 0.0
        %755 = vmatpush1.msra.mxu0 0.0
        %756 = vmatprep.subr.mxu0 0.0
        %757 = vmatpush1.msra.mxu0 0.0
        %758 = vmatprep.subr.mxu0 0.0
        %759 = vmatpush1.msra.mxu0 0.0
        %760 = vmatprep.subr.mxu0 0.0
        %761 = vmatpush1.msra.mxu0 0.0
        %762 = vmatprep.subr.mxu0 0.0
        %763 = vmatpush1.msra.mxu0 0.0
        %764 = vmatprep.subr.mxu0 0.0
        %765 = vmatpush1.msra.mxu0 0.0
        %766 = vmatprep.subr.mxu0 0.0
        %767 = vmatpush1.msra.mxu0 0.0
        %768 = vmatprep.subr.mxu0 0.0
        %769 = vmatpush1.msra.mxu0 0.0
        %770 = vmatprep.subr.mxu0 0.0
        %771 = vmatpush1.msra.mxu0 0.0
        %772 = vmatprep.subr.mxu0 0.0
        %773 = vmatpush1.msra.mxu0 0.0
        %774 = vmatprep.subr.mxu0 0.0
        %775 = vmatpush1.msra.mxu0 0.0
        %776 = vmatprep.subr.mxu0 0.0
        %777 = vmatpush1.msra.mxu0 0.0
        %778 = vmatprep.subr.mxu0 0.0
        %779 = vmatpush1.msra.mxu0 0.0
        %780 = vmatprep.subr.mxu0 0.0
        %781 = vmatpush1.msra.mxu0 0.0
        %782 = vmatprep.subr.mxu0 0.0
        %783 = vmatpush1.msra.mxu0 0.0
        %784 = vmatprep.subr.mxu0 0.0
        %785 = vmatpush1.msra.mxu0 0.0
        %786 = vmatprep.subr.mxu0 0.0
        %787 = vmatpush1.msra.mxu0 0.0
        %788 = vmatprep.subr.mxu0 0.0
        %789 = vmatpush1.msra.mxu0 0.0
        %790 = vmatprep.subr.mxu0 0.0
        %791 = vmatpush1.msra.mxu0 0.0
        %792 = vmatprep.subr.mxu0 0.0
        %793 = vmatpush1.msra.mxu0 0.0
        %794 = vmatprep.subr.mxu0 0.0
        %795 = vmatpush1.msra.mxu0 0.0
        %796 = vmatprep.subr.mxu0 0.0
        %797 = vmatpush1.msra.mxu0 0.0
        %798 = vmatprep.subr.mxu0 0.0
        %799 = vmatpush1.msra.mxu0 0.0
        %800 = vmatprep.subr.mxu0 0.0
        %801 = vmatpush1.msra.mxu0 0.0
        %802 = vmatprep.subr.mxu0 0.0
        %803 = vmatpush1.msra.mxu0 0.0
        %804 = vmatprep.subr.mxu0 0.0
        %805 = vmatpush1.msra.mxu0 0.0
        %806 = vmatprep.subr.mxu0 0.0
        %807 = vmatpush1.msra.mxu0 0.0
        %808 = vmatprep.mubr.f32.mxu0 0.0
        %809 = vmatmul.mubr.f32.gmra.mrb[0].mxu0 %v739
        %v810 = vpop.f32.mrb[0].mxu0
        %v811 = vadd.f32 0.0, %v810
        %v812 = vpop.f32.mrb[0].mxu0
        %813 = vmatprep.mubr.f32.mxu0 0.0
        %814 = vmatmul.mubr.f32.gmra.mrb[0].mxu0 %v742
        %v815 = vpop.f32.mrb[0].mxu0
        %v816 = vadd.f32 0.0, %v815
        %v817 = vpop.f32.mrb[0].mxu0
        %818 = vdwg.mxu0
        %v820 = vsel %vm259, %v724, 0
        %v823 = vsel %vm259, %v725, 0
        %825 = vmatprep.subr.mxu0 0.0
        %826 = vmatpush1.msra.mxu0 %v732
        %827 = vmatprep.subr.mxu0 0.0
        %828 = vmatpush1.msra.mxu0 %v733
        %829 = vmatprep.subr.mxu0 0.0
        %830 = vmatpush1.msra.mxu0 0.0
        %831 = vmatprep.subr.mxu0 0.0
        %832 = vmatpush1.msra.mxu0 0.0
        %833 = vmatprep.subr.mxu0 0.0
        %834 = vmatpush1.msra.mxu0 0.0
        %835 = vmatprep.subr.mxu0 0.0
        %836 = vmatpush1.msra.mxu0 0.0
        %837 = vmatprep.subr.mxu0 0.0
        %838 = vmatpush1.msra.mxu0 0.0
        %839 = vmatprep.subr.mxu0 0.0
        %840 = vmatpush1.msra.mxu0 0.0
        %841 = vmatprep.subr.mxu0 0.0
        %842 = vmatpush1.msra.mxu0 0.0
        %843 = vmatprep.subr.mxu0 0.0
        %844 = vmatpush1.msra.mxu0 0.0
        %845 = vmatprep.subr.mxu0 0.0
        %846 = vmatpush1.msra.mxu0 0.0
        %847 = vmatprep.subr.mxu0 0.0
        %848 = vmatpush1.msra.mxu0 0.0
        %849 = vmatprep.subr.mxu0 0.0
        %850 = vmatpush1.msra.mxu0 0.0
        %851 = vmatprep.subr.mxu0 0.0
        %852 = vmatpush1.msra.mxu0 0.0
        %853 = vmatprep.subr.mxu0 0.0
        %854 = vmatpush1.msra.mxu0 0.0
        %855 = vmatprep.subr.mxu0 0.0
        %856 = vmatpush1.msra.mxu0 0.0
        %857 = vmatprep.subr.mxu0 0.0
        %858 = vmatpush1.msra.mxu0 0.0
        %859 = vmatprep.subr.mxu0 0.0
        %860 = vmatpush1.msra.mxu0 0.0
        %861 = vmatprep.subr.mxu0 0.0
        %862 = vmatpush1.msra.mxu0 0.0
        %863 = vmatprep.subr.mxu0 0.0
        %864 = vmatpush1.msra.mxu0 0.0
        %865 = vmatprep.subr.mxu0 0.0
        %866 = vmatpush1.msra.mxu0 0.0
        %867 = vmatprep.subr.mxu0 0.0
        %868 = vmatpush1.msra.mxu0 0.0
        %869 = vmatprep.subr.mxu0 0.0
        %870 = vmatpush1.msra.mxu0 0.0
        %871 = vmatprep.subr.mxu0 0.0
        %872 = vmatpush1.msra.mxu0 0.0
        %873 = vmatprep.subr.mxu0 0.0
        %874 = vmatpush1.msra.mxu0 0.0
        %875 = vmatprep.subr.mxu0 0.0
        %876 = vmatpush1.msra.mxu0 0.0
        %877 = vmatprep.subr.mxu0 0.0
        %878 = vmatpush1.msra.mxu0 0.0
        %879 = vmatprep.subr.mxu0 0.0
        %880 = vmatpush1.msra.mxu0 0.0
        %881 = vmatprep.subr.mxu0 0.0
        %882 = vmatpush1.msra.mxu0 0.0
        %883 = vmatprep.subr.mxu0 0.0
        %884 = vmatpush1.msra.mxu0 0.0
        %885 = vmatprep.subr.mxu0 0.0
        %886 = vmatpush1.msra.mxu0 0.0
        %887 = vmatprep.subr.mxu0 0.0
        %888 = vmatpush1.msra.mxu0 0.0
        %889 = vmatprep.mubr.f32.mxu0 0.0
        %890 = vmatmul.mubr.f32.gmra.mrb[0].mxu0 %v820
        %v891 = vpop.f32.mrb[0].mxu0
        %v892 = vadd.f32 0.0, %v891
        %v893 = vpop.f32.mrb[0].mxu0
        %894 = vmatprep.mubr.f32.mxu0 0.0
        %895 = vmatmul.mubr.f32.gmra.mrb[0].mxu0 %v823
        %v896 = vpop.f32.mrb[0].mxu0
        %v897 = vadd.f32 0.0, %v896
        %v898 = vpop.f32.mrb[0].mxu0
        %899 = vdwg.mxu0
        %v901 = vsel %vm259, %v726, 0
        %v904 = vsel %vm259, %v727, 0
        %906 = vmatprep.subr.mxu0 0.0
        %907 = vmatpush1.msra.mxu0 %v734
        %908 = vmatprep.subr.mxu0 0.0
        %909 = vmatpush1.msra.mxu0 %v735
        %910 = vmatprep.subr.mxu0 0.0
        %911 = vmatpush1.msra.mxu0 0.0
        %912 = vmatprep.subr.mxu0 0.0
        %913 = vmatpush1.msra.mxu0 0.0
        %914 = vmatprep.subr.mxu0 0.0
        %915 = vmatpush1.msra.mxu0 0.0
        %916 = vmatprep.subr.mxu0 0.0
        %917 = vmatpush1.msra.mxu0 0.0
        %918 = vmatprep.subr.mxu0 0.0
        %919 = vmatpush1.msra.mxu0 0.0
        %920 = vmatprep.subr.mxu0 0.0
        %921 = vmatpush1.msra.mxu0 0.0
        %922 = vmatprep.subr.mxu0 0.0
        %923 = vmatpush1.msra.mxu0 0.0
        %924 = vmatprep.subr.mxu0 0.0
        %925 = vmatpush1.msra.mxu0 0.0
        %926 = vmatprep.subr.mxu0 0.0
        %927 = vmatpush1.msra.mxu0 0.0
        %928 = vmatprep.subr.mxu0 0.0
        %929 = vmatpush1.msra.mxu0 0.0
        %930 = vmatprep.subr.mxu0 0.0
        %931 = vmatpush1.msra.mxu0 0.0
        %932 = vmatprep.subr.mxu0 0.0
        %933 = vmatpush1.msra.mxu0 0.0
        %934 = vmatprep.subr.mxu0 0.0
        %935 = vmatpush1.msra.mxu0 0.0
        %936 = vmatprep.subr.mxu0 0.0
        %937 = vmatpush1.msra.mxu0 0.0
        %938 = vmatprep.subr.mxu0 0.0
        %939 = vmatpush1.msra.mxu0 0.0
        %940 = vmatprep.subr.mxu0 0.0
        %941 = vmatpush1.msra.mxu0 0.0
        %942 = vmatprep.subr.mxu0 0.0
        %943 = vmatpush1.msra.mxu0 0.0
        %944 = vmatprep.subr.mxu0 0.0
        %945 = vmatpush1.msra.mxu0 0.0
        %946 = vmatprep.subr.mxu0 0.0
        %947 = vmatpush1.msra.mxu0 0.0
        %948 = vmatprep.subr.mxu0 0.0
        %949 = vmatpush1.msra.mxu0 0.0
        %950 = vmatprep.subr.mxu0 0.0
        %951 = vmatpush1.msra.mxu0 0.0
        %952 = vmatprep.subr.mxu0 0.0
        %953 = vmatpush1.msra.mxu0 0.0
        %954 = vmatprep.subr.mxu0 0.0
        %955 = vmatpush1.msra.mxu0 0.0
        %956 = vmatprep.subr.mxu0 0.0
        %957 = vmatpush1.msra.mxu0 0.0
        %958 = vmatprep.subr.mxu0 0.0
        %959 = vmatpush1.msra.mxu0 0.0
        %960 = vmatprep.subr.mxu0 0.0
        %961 = vmatpush1.msra.mxu0 0.0
        %962 = vmatprep.subr.mxu0 0.0
        %963 = vmatpush1.msra.mxu0 0.0
        %964 = vmatprep.subr.mxu0 0.0
        %965 = vmatpush1.msra.mxu0 0.0
        %966 = vmatprep.subr.mxu0 0.0
        %967 = vmatpush1.msra.mxu0 0.0
        %968 = vmatprep.subr.mxu0 0.0
        %969 = vmatpush1.msra.mxu0 0.0
        %970 = vmatprep.mubr.f32.mxu0 0.0
        %971 = vmatmul.mubr.f32.gmra.mrb[0].mxu0 %v901
        %v972 = vpop.f32.mrb[0].mxu0
        %v973 = vadd.f32 0.0, %v972
        %v974 = vpop.f32.mrb[0].mxu0
        %975 = vmatprep.mubr.f32.mxu0 0.0
        %976 = vmatmul.mubr.f32.gmra.mrb[0].mxu0 %v904
        %v977 = vpop.f32.mrb[0].mxu0
        %v978 = vadd.f32 0.0, %v977
        %v979 = vpop.f32.mrb[0].mxu0
        %980 = vdwg.mxu0
        %v982 = vsel %vm259, %v728, 0
        %v985 = vsel %vm259, %v729, 0
        %987 = vmatprep.subr.mxu0 0.0
        %988 = vmatpush1.msra.mxu0 %v736
        %989 = vmatprep.subr.mxu0 0.0
        %990 = vmatpush1.msra.mxu0 %v737
        %991 = vmatprep.subr.mxu0 0.0
        %992 = vmatpush1.msra.mxu0 0.0
        %993 = vmatprep.subr.mxu0 0.0
        %994 = vmatpush1.msra.mxu0 0.0
        %995 = vmatprep.subr.mxu0 0.0
        %996 = vmatpush1.msra.mxu0 0.0
        %997 = vmatprep.subr.mxu0 0.0
        %998 = vmatpush1.msra.mxu0 0.0
        %999 = vmatprep.subr.mxu0 0.0
        %1000 = vmatpush1.msra.mxu0 0.0
        %1001 = vmatprep.subr.mxu0 0.0
        %1002 = vmatpush1.msra.mxu0 0.0
        %1003 = vmatprep.subr.mxu0 0.0
        %1004 = vmatpush1.msra.mxu0 0.0
        %1005 = vmatprep.subr.mxu0 0.0
        %1006 = vmatpush1.msra.mxu0 0.0
        %1007 = vmatprep.subr.mxu0 0.0
        %1008 = vmatpush1.msra.mxu0 0.0
        %1009 = vmatprep.subr.mxu0 0.0
        %1010 = vmatpush1.msra.mxu0 0.0
        %1011 = vmatprep.subr.mxu0 0.0
        %1012 = vmatpush1.msra.mxu0 0.0
        %1013 = vmatprep.subr.mxu0 0.0
        %1014 = vmatpush1.msra.mxu0 0.0
        %1015 = vmatprep.subr.mxu0 0.0
        %1016 = vmatpush1.msra.mxu0 0.0
        %1017 = vmatprep.subr.mxu0 0.0
        %1018 = vmatpush1.msra.mxu0 0.0
        %1019 = vmatprep.subr.mxu0 0.0
        %1020 = vmatpush1.msra.mxu0 0.0
        %1021 = vmatprep.subr.mxu0 0.0
        %1022 = vmatpush1.msra.mxu0 0.0
        %1023 = vmatprep.subr.mxu0 0.0
        %1024 = vmatpush1.msra.mxu0 0.0
        %1025 = vmatprep.subr.mxu0 0.0
        %1026 = vmatpush1.msra.mxu0 0.0
        %1027 = vmatprep.subr.mxu0 0.0
        %1028 = vmatpush1.msra.mxu0 0.0
        %1029 = vmatprep.subr.mxu0 0.0
        %1030 = vmatpush1.msra.mxu0 0.0
        %1031 = vmatprep.subr.mxu0 0.0
        %1032 = vmatpush1.msra.mxu0 0.0
        %1033 = vmatprep.subr.mxu0 0.0
        %1034 = vmatpush1.msra.mxu0 0.0
        %1035 = vmatprep.subr.mxu0 0.0
        %1036 = vmatpush1.msra.mxu0 0.0
        %1037 = vmatprep.subr.mxu0 0.0
        %1038 = vmatpush1.msra.mxu0 0.0
        %1039 = vmatprep.subr.mxu0 0.0
        %1040 = vmatpush1.msra.mxu0 0.0
        %1041 = vmatprep.subr.mxu0 0.0
        %1042 = vmatpush1.msra.mxu0 0.0
        %1043 = vmatprep.subr.mxu0 0.0
        %1044 = vmatpush1.msra.mxu0 0.0
        %1045 = vmatprep.subr.mxu0 0.0
        %1046 = vmatpush1.msra.mxu0 0.0
        %1047 = vmatprep.subr.mxu0 0.0
        %1048 = vmatpush1.msra.mxu0 0.0
        %1049 = vmatprep.subr.mxu0 0.0
        %1050 = vmatpush1.msra.mxu0 0.0
        %1051 = vmatprep.mubr.f32.mxu0 0.0
        %1052 = vmatmul.mubr.f32.gmra.mrb[0].mxu0 %v982
        %v1053 = vpop.f32.mrb[0].mxu0
        %v1054 = vadd.f32 0.0, %v1053
        %v1055 = vpop.f32.mrb[0].mxu0
        %1056 = vmatprep.mubr.f32.mxu0 0.0
        %1057 = vmatmul.mubr.f32.gmra.mrb[0].mxu0 %v985
        %v1058 = vpop.f32.mrb[0].mxu0
        %v1059 = vadd.f32 0.0, %v1058
        %v1060 = vpop.f32.mrb[0].mxu0
        %1061 = vdwg.mxu0
        %s1062 = scalar_lea.vmem [#allocation7], 64
        %v1063 = vld [vmem:[%s1062] sm:$0xff]
        %v1064 = vld [vmem:[%s1062 + $0x8] sm:$0xff]
        %v1065 = vld [vmem:[%s1062 + $0x10] sm:$0xff]
        %v1066 = vld [vmem:[%s1062 + $0x18] sm:$0xff]
        %v1067 = vld [vmem:[%s1062 + $0x20] sm:$0xff]
        %v1068 = vld [vmem:[%s1062 + $0x28] sm:$0xff]
        %v1069 = vld [vmem:[%s1062 + $0x30] sm:$0xff]
        %v1070 = vld [vmem:[%s1062 + $0x38] sm:$0xff]
        %1071 = vmatprep.subr.mxu0 0.0
        %1072 = vmatpush1.msra.mxu0 %v1063
        %1073 = vmatprep.subr.mxu0 0.0
        %1074 = vmatpush1.msra.mxu0 %v1064
        %1075 = vmatprep.subr.mxu0 0.0
        %1076 = vmatpush1.msra.mxu0 0.0
        %1077 = vmatprep.subr.mxu0 0.0
        %1078 = vmatpush1.msra.mxu0 0.0
        %1079 = vmatprep.subr.mxu0 0.0
        %1080 = vmatpush1.msra.mxu0 0.0
        %1081 = vmatprep.subr.mxu0 0.0
        %1082 = vmatpush1.msra.mxu0 0.0
        %1083 = vmatprep.subr.mxu0 0.0
        %1084 = vmatpush1.msra.mxu0 0.0
        %1085 = vmatprep.subr.mxu0 0.0
        %1086 = vmatpush1.msra.mxu0 0.0
        %1087 = vmatprep.subr.mxu0 0.0
        %1088 = vmatpush1.msra.mxu0 0.0
        %1089 = vmatprep.subr.mxu0 0.0
        %1090 = vmatpush1.msra.mxu0 0.0
        %1091 = vmatprep.subr.mxu0 0.0
        %1092 = vmatpush1.msra.mxu0 0.0
        %1093 = vmatprep.subr.mxu0 0.0
        %1094 = vmatpush1.msra.mxu0 0.0
        %1095 = vmatprep.subr.mxu0 0.0
        %1096 = vmatpush1.msra.mxu0 0.0
        %1097 = vmatprep.subr.mxu0 0.0
        %1098 = vmatpush1.msra.mxu0 0.0
        %1099 = vmatprep.subr.mxu0 0.0
        %1100 = vmatpush1.msra.mxu0 0.0
        %1101 = vmatprep.subr.mxu0 0.0
        %1102 = vmatpush1.msra.mxu0 0.0
        %1103 = vmatprep.subr.mxu0 0.0
        %1104 = vmatpush1.msra.mxu0 0.0
        %1105 = vmatprep.subr.mxu0 0.0
        %1106 = vmatpush1.msra.mxu0 0.0
        %1107 = vmatprep.subr.mxu0 0.0
        %1108 = vmatpush1.msra.mxu0 0.0
        %1109 = vmatprep.subr.mxu0 0.0
        %1110 = vmatpush1.msra.mxu0 0.0
        %1111 = vmatprep.subr.mxu0 0.0
        %1112 = vmatpush1.msra.mxu0 0.0
        %1113 = vmatprep.subr.mxu0 0.0
        %1114 = vmatpush1.msra.mxu0 0.0
        %1115 = vmatprep.subr.mxu0 0.0
        %1116 = vmatpush1.msra.mxu0 0.0
        %1117 = vmatprep.subr.mxu0 0.0
        %1118 = vmatpush1.msra.mxu0 0.0
        %1119 = vmatprep.subr.mxu0 0.0
        %1120 = vmatpush1.msra.mxu0 0.0
        %1121 = vmatprep.subr.mxu0 0.0
        %1122 = vmatpush1.msra.mxu0 0.0
        %1123 = vmatprep.subr.mxu0 0.0
        %1124 = vmatpush1.msra.mxu0 0.0
        %1125 = vmatprep.subr.mxu0 0.0
        %1126 = vmatpush1.msra.mxu0 0.0
        %1127 = vmatprep.subr.mxu0 0.0
        %1128 = vmatpush1.msra.mxu0 0.0
        %1129 = vmatprep.subr.mxu0 0.0
        %1130 = vmatpush1.msra.mxu0 0.0
        %1131 = vmatprep.subr.mxu0 0.0
        %1132 = vmatpush1.msra.mxu0 0.0
        %1133 = vmatprep.subr.mxu0 0.0
        %1134 = vmatpush1.msra.mxu0 0.0
        %1135 = vmatprep.mubr.f32.mxu0 0.0
        %1136 = vmatmul.mubr.f32.gmra.mrb[0].mxu0 %v739
        %v1137 = vpop.f32.mrb[0].mxu0
        %v1138 = vadd.f32 0.0, %v1137
        %v1139 = vpop.f32.mrb[0].mxu0
        %1140 = vmatprep.mubr.f32.mxu0 0.0
        %1141 = vmatmul.mubr.f32.gmra.mrb[0].mxu0 %v742
        %v1142 = vpop.f32.mrb[0].mxu0
        %v1143 = vadd.f32 0.0, %v1142
        %v1144 = vpop.f32.mrb[0].mxu0
        %1145 = vdwg.mxu0
        %1146 = vmatprep.subr.mxu0 0.0
        %1147 = vmatpush1.msra.mxu0 %v1065
        %1148 = vmatprep.subr.mxu0 0.0
        %1149 = vmatpush1.msra.mxu0 %v1066
        %1150 = vmatprep.subr.mxu0 0.0
        %1151 = vmatpush1.msra.mxu0 0.0
        %1152 = vmatprep.subr.mxu0 0.0
        %1153 = vmatpush1.msra.mxu0 0.0
        %1154 = vmatprep.subr.mxu0 0.0
        %1155 = vmatpush1.msra.mxu0 0.0
        %1156 = vmatprep.subr.mxu0 0.0
        %1157 = vmatpush1.msra.mxu0 0.0
        %1158 = vmatprep.subr.mxu0 0.0
        %1159 = vmatpush1.msra.mxu0 0.0
        %1160 = vmatprep.subr.mxu0 0.0
        %1161 = vmatpush1.msra.mxu0 0.0
        %1162 = vmatprep.subr.mxu0 0.0
        %1163 = vmatpush1.msra.mxu0 0.0
        %1164 = vmatprep.subr.mxu0 0.0
        %1165 = vmatpush1.msra.mxu0 0.0
        %1166 = vmatprep.subr.mxu0 0.0
        %1167 = vmatpush1.msra.mxu0 0.0
        %1168 = vmatprep.subr.mxu0 0.0
        %1169 = vmatpush1.msra.mxu0 0.0
        %1170 = vmatprep.subr.mxu0 0.0
        %1171 = vmatpush1.msra.mxu0 0.0
        %1172 = vmatprep.subr.mxu0 0.0
        %1173 = vmatpush1.msra.mxu0 0.0
        %1174 = vmatprep.subr.mxu0 0.0
        %1175 = vmatpush1.msra.mxu0 0.0
        %1176 = vmatprep.subr.mxu0 0.0
        %1177 = vmatpush1.msra.mxu0 0.0
        %1178 = vmatprep.subr.mxu0 0.0
        %1179 = vmatpush1.msra.mxu0 0.0
        %1180 = vmatprep.subr.mxu0 0.0
        %1181 = vmatpush1.msra.mxu0 0.0
        %1182 = vmatprep.subr.mxu0 0.0
        %1183 = vmatpush1.msra.mxu0 0.0
        %1184 = vmatprep.subr.mxu0 0.0
        %1185 = vmatpush1.msra.mxu0 0.0
        %1186 = vmatprep.subr.mxu0 0.0
        %1187 = vmatpush1.msra.mxu0 0.0
        %1188 = vmatprep.subr.mxu0 0.0
        %1189 = vmatpush1.msra.mxu0 0.0
        %1190 = vmatprep.subr.mxu0 0.0
        %1191 = vmatpush1.msra.mxu0 0.0
        %1192 = vmatprep.subr.mxu0 0.0
        %1193 = vmatpush1.msra.mxu0 0.0
        %1194 = vmatprep.subr.mxu0 0.0
        %1195 = vmatpush1.msra.mxu0 0.0
        %1196 = vmatprep.subr.mxu0 0.0
        %1197 = vmatpush1.msra.mxu0 0.0
        %1198 = vmatprep.subr.mxu0 0.0
        %1199 = vmatpush1.msra.mxu0 0.0
        %1200 = vmatprep.subr.mxu0 0.0
        %1201 = vmatpush1.msra.mxu0 0.0
        %1202 = vmatprep.subr.mxu0 0.0
        %1203 = vmatpush1.msra.mxu0 0.0
        %1204 = vmatprep.subr.mxu0 0.0
        %1205 = vmatpush1.msra.mxu0 0.0
        %1206 = vmatprep.subr.mxu0 0.0
        %1207 = vmatpush1.msra.mxu0 0.0
        %1208 = vmatprep.subr.mxu0 0.0
        %1209 = vmatpush1.msra.mxu0 0.0
        %1210 = vmatprep.mubr.f32.mxu0 0.0
        %1211 = vmatmul.mubr.f32.gmra.mrb[0].mxu0 %v820
        %v1212 = vpop.f32.mrb[0].mxu0
        %v1213 = vadd.f32 0.0, %v1212
        %v1214 = vpop.f32.mrb[0].mxu0
        %1215 = vmatprep.mubr.f32.mxu0 0.0
        %1216 = vmatmul.mubr.f32.gmra.mrb[0].mxu0 %v823
        %v1217 = vpop.f32.mrb[0].mxu0
        %v1218 = vadd.f32 0.0, %v1217
        %v1219 = vpop.f32.mrb[0].mxu0
        %1220 = vdwg.mxu0
        %1221 = vmatprep.subr.mxu0 0.0
        %1222 = vmatpush1.msra.mxu0 %v1067
        %1223 = vmatprep.subr.mxu0 0.0
        %1224 = vmatpush1.msra.mxu0 %v1068
        %1225 = vmatprep.subr.mxu0 0.0
        %1226 = vmatpush1.msra.mxu0 0.0
        %1227 = vmatprep.subr.mxu0 0.0
        %1228 = vmatpush1.msra.mxu0 0.0
        %1229 = vmatprep.subr.mxu0 0.0
        %1230 = vmatpush1.msra.mxu0 0.0
        %1231 = vmatprep.subr.mxu0 0.0
        %1232 = vmatpush1.msra.mxu0 0.0
        %1233 = vmatprep.subr.mxu0 0.0
        %1234 = vmatpush1.msra.mxu0 0.0
        %1235 = vmatprep.subr.mxu0 0.0
        %1236 = vmatpush1.msra.mxu0 0.0
        %1237 = vmatprep.subr.mxu0 0.0
        %1238 = vmatpush1.msra.mxu0 0.0
        %1239 = vmatprep.subr.mxu0 0.0
        %1240 = vmatpush1.msra.mxu0 0.0
        %1241 = vmatprep.subr.mxu0 0.0
        %1242 = vmatpush1.msra.mxu0 0.0
        %1243 = vmatprep.subr.mxu0 0.0
        %1244 = vmatpush1.msra.mxu0 0.0
        %1245 = vmatprep.subr.mxu0 0.0
        %1246 = vmatpush1.msra.mxu0 0.0
        %1247 = vmatprep.subr.mxu0 0.0
        %1248 = vmatpush1.msra.mxu0 0.0
        %1249 = vmatprep.subr.mxu0 0.0
        %1250 = vmatpush1.msra.mxu0 0.0
        %1251 = vmatprep.subr.mxu0 0.0
        %1252 = vmatpush1.msra.mxu0 0.0
        %1253 = vmatprep.subr.mxu0 0.0
        %1254 = vmatpush1.msra.mxu0 0.0
        %1255 = vmatprep.subr.mxu0 0.0
        %1256 = vmatpush1.msra.mxu0 0.0
        %1257 = vmatprep.subr.mxu0 0.0
        %1258 = vmatpush1.msra.mxu0 0.0
        %1259 = vmatprep.subr.mxu0 0.0
        %1260 = vmatpush1.msra.mxu0 0.0
        %1261 = vmatprep.subr.mxu0 0.0
        %1262 = vmatpush1.msra.mxu0 0.0
        %1263 = vmatprep.subr.mxu0 0.0
        %1264 = vmatpush1.msra.mxu0 0.0
        %1265 = vmatprep.subr.mxu0 0.0
        %1266 = vmatpush1.msra.mxu0 0.0
        %1267 = vmatprep.subr.mxu0 0.0
        %1268 = vmatpush1.msra.mxu0 0.0
        %1269 = vmatprep.subr.mxu0 0.0
        %1270 = vmatpush1.msra.mxu0 0.0
        %1271 = vmatprep.subr.mxu0 0.0
        %1272 = vmatpush1.msra.mxu0 0.0
        %1273 = vmatprep.subr.mxu0 0.0
        %1274 = vmatpush1.msra.mxu0 0.0
        %1275 = vmatprep.subr.mxu0 0.0
        %1276 = vmatpush1.msra.mxu0 0.0
        %1277 = vmatprep.subr.mxu0 0.0
        %1278 = vmatpush1.msra.mxu0 0.0
        %1279 = vmatprep.subr.mxu0 0.0
        %1280 = vmatpush1.msra.mxu0 0.0
        %1281 = vmatprep.subr.mxu0 0.0
        %1282 = vmatpush1.msra.mxu0 0.0
        %1283 = vmatprep.subr.mxu0 0.0
        %1284 = vmatpush1.msra.mxu0 0.0
        %1285 = vmatprep.mubr.f32.mxu0 0.0
        %1286 = vmatmul.mubr.f32.gmra.mrb[0].mxu0 %v901
        %v1287 = vpop.f32.mrb[0].mxu0
        %v1288 = vadd.f32 0.0, %v1287
        %v1289 = vpop.f32.mrb[0].mxu0
        %1290 = vmatprep.mubr.f32.mxu0 0.0
        %1291 = vmatmul.mubr.f32.gmra.mrb[0].mxu0 %v904
        %v1292 = vpop.f32.mrb[0].mxu0
        %v1293 = vadd.f32 0.0, %v1292
        %v1294 = vpop.f32.mrb[0].mxu0
        %1295 = vdwg.mxu0
        %1296 = vmatprep.subr.mxu0 0.0
        %1297 = vmatpush1.msra.mxu0 %v1069
        %1298 = vmatprep.subr.mxu0 0.0
        %1299 = vmatpush1.msra.mxu0 %v1070
        %1300 = vmatprep.subr.mxu0 0.0
        %1301 = vmatpush1.msra.mxu0 0.0
        %1302 = vmatprep.subr.mxu0 0.0
        %1303 = vmatpush1.msra.mxu0 0.0
        %1304 = vmatprep.subr.mxu0 0.0
        %1305 = vmatpush1.msra.mxu0 0.0
        %1306 = vmatprep.subr.mxu0 0.0
        %1307 = vmatpush1.msra.mxu0 0.0
        %1308 = vmatprep.subr.mxu0 0.0
        %1309 = vmatpush1.msra.mxu0 0.0
        %1310 = vmatprep.subr.mxu0 0.0
        %1311 = vmatpush1.msra.mxu0 0.0
        %1312 = vmatprep.subr.mxu0 0.0
        %1313 = vmatpush1.msra.mxu0 0.0
        %1314 = vmatprep.subr.mxu0 0.0
        %1315 = vmatpush1.msra.mxu0 0.0
        %1316 = vmatprep.subr.mxu0 0.0
        %1317 = vmatpush1.msra.mxu0 0.0
        %1318 = vmatprep.subr.mxu0 0.0
        %1319 = vmatpush1.msra.mxu0 0.0
        %1320 = vmatprep.subr.mxu0 0.0
        %1321 = vmatpush1.msra.mxu0 0.0
        %1322 = vmatprep.subr.mxu0 0.0
        %1323 = vmatpush1.msra.mxu0 0.0
        %1324 = vmatprep.subr.mxu0 0.0
        %1325 = vmatpush1.msra.mxu0 0.0
        %1326 = vmatprep.subr.mxu0 0.0
        %1327 = vmatpush1.msra.mxu0 0.0
        %1328 = vmatprep.subr.mxu0 0.0
        %1329 = vmatpush1.msra.mxu0 0.0
        %1330 = vmatprep.subr.mxu0 0.0
        %1331 = vmatpush1.msra.mxu0 0.0
        %1332 = vmatprep.subr.mxu0 0.0
        %1333 = vmatpush1.msra.mxu0 0.0
        %1334 = vmatprep.subr.mxu0 0.0
        %1335 = vmatpush1.msra.mxu0 0.0
        %1336 = vmatprep.subr.mxu0 0.0
        %1337 = vmatpush1.msra.mxu0 0.0
        %1338 = vmatprep.subr.mxu0 0.0
        %1339 = vmatpush1.msra.mxu0 0.0
        %1340 = vmatprep.subr.mxu0 0.0
        %1341 = vmatpush1.msra.mxu0 0.0
        %1342 = vmatprep.subr.mxu0 0.0
        %1343 = vmatpush1.msra.mxu0 0.0
        %1344 = vmatprep.subr.mxu0 0.0
        %1345 = vmatpush1.msra.mxu0 0.0
        %1346 = vmatprep.subr.mxu0 0.0
        %1347 = vmatpush1.msra.mxu0 0.0
        %1348 = vmatprep.subr.mxu0 0.0
        %1349 = vmatpush1.msra.mxu0 0.0
        %1350 = vmatprep.subr.mxu0 0.0
        %1351 = vmatpush1.msra.mxu0 0.0
        %1352 = vmatprep.subr.mxu0 0.0
        %1353 = vmatpush1.msra.mxu0 0.0
        %1354 = vmatprep.subr.mxu0 0.0
        %1355 = vmatpush1.msra.mxu0 0.0
        %1356 = vmatprep.subr.mxu0 0.0
        %1357 = vmatpush1.msra.mxu0 0.0
        %1358 = vmatprep.subr.mxu0 0.0
        %1359 = vmatpush1.msra.mxu0 0.0
        %1360 = vmatprep.mubr.f32.mxu0 0.0
        %1361 = vmatmul.mubr.f32.gmra.mrb[0].mxu0 %v982
        %v1362 = vpop.f32.mrb[0].mxu0
        %v1363 = vadd.f32 0.0, %v1362
        %v1364 = vpop.f32.mrb[0].mxu0
        %1365 = vmatprep.mubr.f32.mxu0 0.0
        %1366 = vmatmul.mubr.f32.gmra.mrb[0].mxu0 %v985
        %v1367 = vpop.f32.mrb[0].mxu0
        %v1368 = vadd.f32 0.0, %v1367
        %v1369 = vpop.f32.mrb[0].mxu0
        %1370 = vdwg.mxu0
        %1371 = vst.msk [vmem:[%s242] sm:$0xff] %vm259, %v811
        %1372 = vst.msk [vmem:[%s242 + $0x8] sm:$0xff] %vm259, %v816
        %1373 = vst.msk [vmem:[%s242 + $0x10] sm:$0xff] %vm259, %v1138
        %1374 = vst.msk [vmem:[%s242 + $0x18] sm:$0xff] %vm259, %v1143
        %1375 = vst.msk [vmem:[%s242 + $0x20] sm:$0xff] %vm259, %v892
        %1376 = vst.msk [vmem:[%s242 + $0x28] sm:$0xff] %vm259, %v897
        %1377 = vst.msk [vmem:[%s242 + $0x30] sm:$0xff] %vm259, %v1213
        %1378 = vst.msk [vmem:[%s242 + $0x38] sm:$0xff] %vm259, %v1218
        %1379 = vst.msk [vmem:[%s242 + $0x40] sm:$0xff] %vm259, %v973
        %1380 = vst.msk [vmem:[%s242 + $0x48] sm:$0xff] %vm259, %v978
        %1381 = vst.msk [vmem:[%s242 + $0x50] sm:$0xff] %vm259, %v1288
        %1382 = vst.msk [vmem:[%s242 + $0x58] sm:$0xff] %vm259, %v1293
        %1383 = vst.msk [vmem:[%s242 + $0x60] sm:$0xff] %vm259, %v1054
        %1384 = vst.msk [vmem:[%s242 + $0x68] sm:$0xff] %vm259, %v1059
        %1385 = vst.msk [vmem:[%s242 + $0x70] sm:$0xff] %vm259, %v1363
        %1386 = vst.msk [vmem:[%s242 + $0x78] sm:$0xff] %vm259, %v1368
        %s1387 = sand.u32 %s104, 1
        %s1388 = scalar_lea.sflag [#allocation4], %s1387
        %s1389 = sand.u32 %s104, 1
        %s1390 = smul.addr %s1389, 128
        %s1391 = scalar_lea.vmem [#allocation8], %s1390
        // Predicated region
        $region45: #{tpu_custom_call.1} parent=31 // pred_check
          %p1392 = pneg %p114
        $region46: #{tpu_custom_call.1} parent=31 // pred_check_branch
          %1394 = sbr.rel (%p1392) target = $region48
        $region47: #{tpu_custom_call.1} parent=31 // pred_region
          %s1396 = ssub.s32 2048, 2048
          %1397 = vsyncadd %s1388, %s1396
          %s1398 = smul.addr %s23, 16
          %s1399 = smul.addr %s1398, 128
          %s1400 = scalar_lea.hbm %s3, %s1399
          %s1401 = sshll.u32 %s1391, 4
          %s1402 = int_to_ptr.vmem [resolvable:$true] %s1401
          %1407 = dma.vmem_to_hbm [thread:$0]  %s1402, 2048, %s1400, %s1388, 128, 128, 8
        $region48: #{tpu_custom_call.1} parent=31 // pred_fallthru
          _
      $region32: #{tpu_custom_call.1} parent=5 // pred_fallthru
        _
      %p1408 = scmp.le.s32.totalorder 2, %s18
      // Predicated region
      $region49: #{tpu_custom_call.1} parent=5 // pred_check
        %p1409 = pneg %p1408
      $region50: #{tpu_custom_call.1} parent=5 // pred_check_branch
        %1411 = sbr.rel (%p1409) target = $region52
      $region51: #{tpu_custom_call.1} parent=5 // pred_region
        %s1412 = ssub.s32 %s18, 2
        // Predicated region
        $region53: #{tpu_custom_call.1} parent=51 // pred_check
          %p1413 = pneg %p120
        $region54: #{tpu_custom_call.1} parent=51 // pred_check_branch
          %1415 = sbr.rel (%p1413) target = $region56
        $region55: #{tpu_custom_call.1} parent=51 // pred_region
          %s1416 = sand.u32 %s105, 1
          %s1417 = scalar_lea.sflag [#allocation4], %s1416
          %s1418 = sand.u32 %s105, 1
          %s1419 = smul.addr %s1418, 128
          %s1420 = scalar_lea.vmem [#allocation8], %s1419
          %1421 = dma.done %s1417, 2048
        $region56: #{tpu_custom_call.1} parent=51 // pred_fallthru
          _
      $region52: #{tpu_custom_call.1} parent=5 // pred_fallthru
        _
    $region6: #{tpu_custom_call.1} parent=1 // loop_footer
      %s22 = sadd.s32 1, %s18
    $region7: #{tpu_custom_call.1} parent=1 // loop_footer_branch
      %17 = sbr.rel target = $region3
    $region8: #{tpu_custom_call.1} parent=1 // loop_exit
      _
    %1422 = vsyncpa [#allocation3], 1
    %s1423 = scalar_lea.sflag [#allocation3], 1
    %1424 = vsyncpa %s1423, 1
    %1425 = vsyncpa [#allocation6], 1
    %s1426 = scalar_lea.sflag [#allocation6], 1
    %1427 = vsyncpa %s1426, 1
    %1428 = vsyncpa [#allocation4], 1
    %s1429 = scalar_lea.sflag [#allocation4], 1
    %1430 = vsyncpa %s1429, 1

</llo_original>
